<compile_context>
chip_gen: v6e
topology: v6e:2x2x1
jax: 0.10.0
libtpu: 0.0.40
codegen_flags: <defaults>
</compile_context>

<pallas_src>
import functools

import jax
import jax.numpy as jnp
from jax.experimental import pallas as pl
from jax.experimental.pallas import tpu as pltpu


def _round_up(x: int, m: int) -> int:
    return ((x + m - 1) // m) * m


def _sublane_multiple(dtype) -> int:
    # Sublane packing: f32 -> 8 rows/vreg, bf16 -> 16, int8/fp8 -> 32.
    return max(8, 32 // jnp.dtype(dtype).itemsize)


def _pick_tile(dim: int, max_tile: int, align: int, floor: int = 128) -> int:
    """Pick a tile size for one dim.

    Small dims use their full (aligned) extent.  Large dims pick the
    power-of-two candidate <= max_tile (and >= floor) that minimizes padding
    waste, preferring the larger tile on ties.
    """
    dim_al = _round_up(max(int(dim), 1), align)
    if dim_al <= max_tile:
        return dim_al
    floor = max(align, min(floor, max_tile))
    best, best_key = None, None
    cand = max_tile
    while cand >= floor:
        padded = _round_up(dim_al, cand)
        key = (padded, -cand)          # minimize padding, prefer larger tile
        if best_key is None or key < best_key:
            best, best_key = cand, key
        cand //= 2
    return best


def _matmul_bias_inplace_kernel(x_ref, w_ref, b_ref, o_ref):
    """One (i, j, k) step of Y = X @ W + b, accumulating directly into the
    f32 output block (VMEM-resident across k).  No scratch accumulator and no
    epilogue copy -> saves a full-tile vld+vst per output tile."""
    k = pl.program_id(2)

    @pl.when(k == 0)
    def _init():
        # Fold the bias into the accumulator init (broadcast over rows).
        o_ref[...] = jnp.broadcast_to(b_ref[...].astype(o_ref.dtype), o_ref.shape)

    o_ref[...] += jnp.dot(x_ref[...], w_ref[...],
                          preferred_element_type=jnp.float32)


def _matmul_bias_acc_kernel(x_ref, w_ref, b_ref, o_ref, acc_ref):
    """Same step, but with an f32 scratch accumulator for non-f32 outputs."""
    k = pl.program_id(2)

    @pl.when(k == 0)
    def _init():
        acc_ref[...] = jnp.broadcast_to(b_ref[...].astype(jnp.float32),
                                        acc_ref.shape)

    acc_ref[...] += jnp.dot(x_ref[...], w_ref[...],
                            preferred_element_type=jnp.float32)

    @pl.when(k == pl.num_programs(2) - 1)
    def _fin():
        o_ref[...] = acc_ref[...].astype(o_ref.dtype)


@functools.partial(
    jax.jit,
    static_argnames=("tm_e", "tn_e", "tk_e", "out_cols", "compute_dtype"))
def _linear_forward_2d(x2d, w_hp_op, bias_1_op, *, tm_e, tn_e, tk_e, out_cols,
                       compute_dtype):
    """out[:M, :out_cols] = x2d @ w_hp_op[:H, :out_cols] + bias."""
    M, H = x2d.shape
    Hp, Op = w_hp_op.shape
    out_dtype = x2d.dtype

    Mp = _round_up(M, tm_e)
    # Cast activations to the MXU-native dtype and zero-pad M/K to tile
    # multiples (one fused XLA pass; zero K-padding contributes nothing).
    x_c = x2d.astype(compute_dtype)
    if Mp != M or Hp != H:
        x_c = jnp.pad(x_c, ((0, Mp - M), (0, Hp - H)))

    grid = (Mp // tm_e, Op // tn_e, Hp // tk_e)

    use_inplace = out_dtype == jnp.float32
    kernel = _matmul_bias_inplace_kernel if use_inplace else _matmul_bias_acc_kernel
    scratch = [] if use_inplace else [pltpu.VMEM((tm_e, tn_e), jnp.float32)]

    cbytes = jnp.dtype(compute_dtype).itemsize
    obytes = jnp.dtype(out_dtype).itemsize
    bbytes = jnp.dtype(bias_1_op.dtype).itemsize

    # Scoped-VMEM request derived from the actual working set (double-buffered
    # streams + resident accumulator) plus headroom; never the whole chip
    # (v7x has only 64 MiB of VMEM per TensorCore).
    working_set = (2 * tm_e * tk_e * cbytes        # X tiles (double buffered)
                   + 2 * tk_e * tn_e * cbytes      # W^T tiles
                   + 2 * tm_e * tn_e * obytes      # output tiles
                   + 2 * tn_e * bbytes             # bias tiles
                   + (0 if use_inplace else tm_e * tn_e * 4))
    vmem_limit = int(min(max(2 * working_set, 32 * 1024 * 1024),
                         48 * 1024 * 1024))

    # True HBM traffic (X re-read once per j-tile, W re-read once per i-tile).
    cost = pl.CostEstimate(
        flops=2 * Mp * Op * Hp,
        transcendentals=0,
        bytes_accessed=(Mp * Hp * cbytes * (Op // tn_e)
                        + Hp * Op * cbytes * (Mp // tm_e)
                        + Op * bbytes * (Mp // tm_e)
                        + Mp * Op * obytes),
    )

    out2d = pl.pallas_call(
        kernel,
        out_shape=jax.ShapeDtypeStruct((Mp, Op), out_dtype),
        grid_spec=pltpu.PrefetchScalarGridSpec(
            num_scalar_prefetch=0,
            grid=grid,
            in_specs=[
                pl.BlockSpec((tm_e, tk_e), lambda i, j, k: (i, k)),  # X    [M, K]
                pl.BlockSpec((tk_e, tn_e), lambda i, j, k: (k, j)),  # W^T  [K, N]
                pl.BlockSpec((1, tn_e), lambda i, j, k: (0, j)),     # bias [1, N]
            ],
            out_specs=pl.BlockSpec((tm_e, tn_e), lambda i, j, k: (i, j)),
            scratch_shapes=scratch,
        ),
        compiler_params=pltpu.CompilerParams(
            dimension_semantics=("parallel", "parallel", "arbitrary"),
            vmem_limit_bytes=vmem_limit,
        ),
        cost_estimate=cost,
    )(x_c, w_hp_op, bias_1_op)

    return out2d[:M, :out_cols]


class ColumnParallelLinearTPU:
    """Forward-only TPU port of Megatron's ColumnParallelLinear at tensor-parallel
    world_size == 1 (the copy/gather collectives are identities).

        Y = X @ A^T + b,   X: [s, b, input_size],
                           weight: [output_size_per_partition, input_size],
                           bias:   [output_size_per_partition] (zero-init).

    __call__(x) -> (output [s, b, output_size_per_partition], output_bias)
    with output_bias=None unless skip_bias_add=True (matching the module).
    """

    def __init__(self, weight, bias=None, *, skip_bias_add=False,
                 tm=512, tn=1024, tk=1024, compute_dtype=jnp.bfloat16):
        weight = jnp.asarray(weight)
        assert weight.ndim == 2, "weight must be [output_size_per_partition, input_size]"
        O, H = weight.shape
        self.output_size_per_partition = O
        self.input_size = H
        self.skip_bias_add = bool(skip_bias_add)
        self.compute_dtype = jnp.dtype(compute_dtype)
        self.tm = int(tm)

        # Tile sizes chosen once from the weight dims (padding-waste aware).
        self.tn_e = _pick_tile(O, int(tn), 128)
        self.tk_e = _pick_tile(H, int(tk), 128, floor=256)
        Op = _round_up(O, self.tn_e)
        Hp = _round_up(H, self.tk_e)

        # One-time weight prep (NOT per forward call): transpose to NN-form
        # [H, O], cast to the MXU-native compute dtype, zero-pad to tiles.
        w_t = weight.T.astype(self.compute_dtype)
        if Hp != H or Op != O:
            w_t = jnp.pad(w_t, ((0, Hp - H), (0, Op - O)))
        self.w_prepared = w_t                                    # [Hp, Op]

        if bias is None:
            bias = jnp.zeros((O,), dtype=weight.dtype)           # module zero-inits bias
        bias = jnp.asarray(bias)
        assert bias.shape == (O,)
        self.bias = bias
        b2d = bias.reshape(1, O)
        if Op != O:
            b2d = jnp.pad(b2d, ((0, 0), (0, Op - O)))
        self.bias_prepared = b2d                                 # [1, Op]
        self._zero_bias_prepared = jnp.zeros_like(b2d)

    def __call__(self, input_):
        x = jnp.asarray(input_)
        assert x.ndim == 3, "input_ must be [sequence, batch, hidden]"
        S, B, H = x.shape
        assert H == self.input_size
        M = S * B

        # Dtype-aware sublane rounding for the M (sublane) tile dim.
        sub = _sublane_multiple(self.compute_dtype)
        tm_e = _pick_tile(M, self.tm, sub)

        bias2d = (self._zero_bias_prepared if self.skip_bias_add
                  else self.bias_prepared)

        out2d = _linear_forward_2d(
            x.reshape(M, H), self.w_prepared, bias2d,
            tm_e=tm_e, tn_e=self.tn_e, tk_e=self.tk_e,
            out_cols=self.output_size_per_partition,
            compute_dtype=self.compute_dtype)

        output = out2d.reshape(S, B, self.output_size_per_partition)
        output_bias = self.bias if self.skip_bias_add else None
        return output, output_bias


if __name__ == "__main__":
    key = jax.random.PRNGKey(0)
    k1, k2, k3, k4, k5, k6 = jax.random.split(key, 6)

    # ---- Test 1: aligned small shapes, f32 params, [sequence, batch, hidden] ----
    seq, batch, hidden = 8, 2, 128
    output_size = 256           # output_size_per_partition (world_size = 1)

    x = jax.random.normal(k1, (seq, batch, hidden), dtype=jnp.float32)
    weight = 0.02 * jax.random.normal(k2, (output_size, hidden), dtype=jnp.float32)
    bias = jnp.zeros((output_size,), dtype=jnp.float32)

    layer = ColumnParallelLinearTPU(weight, bias)
    out, out_bias = layer(x)
    out = jax.block_until_ready(out)

    # Reference with the same bf16 operand rounding, f32 accumulation.
    ref = jnp.einsum(
        "sbh,oh->sbo",
        x.astype(jnp.bfloat16).astype(jnp.float32),
        weight.astype(jnp.bfloat16).astype(jnp.float32),
        precision=jax.lax.Precision.HIGHEST) + bias
    assert out.shape == (seq, batch, output_size)
    assert out.dtype == x.dtype
    assert out_bias is None
    assert jnp.allclose(out, ref, atol=2e-3, rtol=2e-3), "mismatch (aligned)"

    # ---- Test 2: ragged shapes exercise the padding / tile-clamp path ----
    seq2, batch2, hidden2, out2_size = 5, 3, 96, 200
    x2 = jax.random.normal(k3, (seq2, batch2, hidden2), dtype=jnp.float32)
    weight2 = 0.02 * jax.random.normal(k4, (out2_size, hidden2), dtype=jnp.float32)

    layer2 = ColumnParallelLinearTPU(weight2, None)
    out_b, out_bias_b = layer2(x2)
    out_b = jax.block_until_ready(out_b)

    ref2 = jnp.einsum(
        "sbh,oh->sbo",
        x2.astype(jnp.bfloat16).astype(jnp.float32),
        weight2.astype(jnp.bfloat16).astype(jnp.float32),
        precision=jax.lax.Precision.HIGHEST)
    assert out_b.shape == (seq2, batch2, out2_size)
    assert out_bias_b is None
    assert jnp.allclose(out_b, ref2, atol=2e-3, rtol=2e-3), "mismatch (padded)"

    # ---- Test 3: bf16 params, multi-step K reduction (scratch-acc kernel path) ----
    seq3, batch3, hidden3, out3_size = 8, 2, 2048, 512
    x3 = jax.random.normal(k5, (seq3, batch3, hidden3), dtype=jnp.float32).astype(jnp.bfloat16)
    weight3 = (0.02 * jax.random.normal(k6, (out3_size, hidden3),
                                        dtype=jnp.float32)).astype(jnp.bfloat16)

    layer3 = ColumnParallelLinearTPU(weight3, None)
    out_c, out_bias_c = layer3(x3)
    out_c = jax.block_until_ready(out_c)

    ref3 = jnp.einsum("sbh,oh->sbo",
                      x3.astype(jnp.float32), weight3.astype(jnp.float32),
                      precision=jax.lax.Precision.HIGHEST)
    assert out_c.shape == (seq3, batch3, out3_size)
    assert out_c.dtype == jnp.bfloat16
    assert out_bias_c is None
    assert jnp.allclose(out_c.astype(jnp.float32), ref3, atol=2e-2, rtol=2e-2), \
        "mismatch (bf16, multi-k)"

    print("KERNEL_OK")
</pallas_src>

<mosaic_0001>
module attributes {stable_mosaic.version = 11 : i64} {
  func.func @_matmul_bias_inplace_kernel(%arg0: i32, %arg1: i32, %arg2: i32, %arg3: memref<16x128xbf16, #tpu.memory_space<vmem>>, %arg4: memref<128x256xbf16, #tpu.memory_space<vmem>>, %arg5: memref<1x256xf32, #tpu.memory_space<vmem>>, %arg6: memref<16x256xf32, #tpu.memory_space<vmem>>) attributes {dimension_semantics = [#tpu.dimension_semantics<parallel>, #tpu.dimension_semantics<parallel>, #tpu.dimension_semantics<arbitrary>], iteration_bounds = array<i64: 1, 1, 1>, scalar_prefetch = 0 : i64, scratch_operands = 0 : i64, tpu.core_type = #tpu.core_type<tc>, window_params = [{transform_indices = @transform_0, window_bounds = array<i64: 16, 128>}, {transform_indices = @transform_1, window_bounds = array<i64: 128, 256>}, {transform_indices = @transform_2, window_bounds = array<i64: 1, 256>}, {transform_indices = @transform_3, window_bounds = array<i64: 16, 256>}]} {
    %c0_i32 = arith.constant 0 : i32
    %0 = arith.cmpi eq, %arg2, %c0_i32 : i32
    %1 = arith.extui %0 : i1 to i32
    %c0_i32_0 = arith.constant 0 : i32
    %2 = arith.cmpi ne, %1, %c0_i32_0 : i32
    scf.if %2 {
      %c0_8 = arith.constant 0 : index
      %c0_9 = arith.constant 0 : index
      %9 = vector.load %arg5[%c0_8, %c0_9] : memref<1x256xf32, #tpu.memory_space<vmem>>, vector<1x256xf32>
      %10 = vector.shape_cast %9 : vector<1x256xf32> to vector<1x256xf32>
      %11 = vector.broadcast %10 : vector<1x256xf32> to vector<16x256xf32>
      %c0_10 = arith.constant 0 : index
      %c0_11 = arith.constant 0 : index
      %12 = vector.load %arg6[%c0_10, %c0_11] : memref<16x256xf32, #tpu.memory_space<vmem>>, vector<16x256xf32>
      tpu.vector_store %arg6[%c0_10, %c0_11], %11 {strides = array<i32>} : memref<16x256xf32, #tpu.memory_space<vmem>>, vector<16x256xf32>,
    } else {
    }
    %c0 = arith.constant 0 : index
    %c0_1 = arith.constant 0 : index
    %3 = vector.load %arg6[%c0, %c0_1] : memref<16x256xf32, #tpu.memory_space<vmem>>, vector<16x256xf32>
    %c0_2 = arith.constant 0 : index
    %c0_3 = arith.constant 0 : index
    %4 = vector.load %arg3[%c0_2, %c0_3] : memref<16x128xbf16, #tpu.memory_space<vmem>>, vector<16x128xbf16>
    %c0_4 = arith.constant 0 : index
    %c0_5 = arith.constant 0 : index
    %5 = vector.load %arg4[%c0_4, %c0_5] : memref<128x256xbf16, #tpu.memory_space<vmem>>, vector<128x256xbf16>
    %cst = arith.constant dense<0.000000e+00> : vector<16x256xf32>
    %6 = tpu.matmul %4, %5, %cst {dimension_numbers = #tpu.dot_dimension_numbers<[1], [0], [0], [1], [0, 0, 1, 1], [], []>} : vector<16x128xbf16>, vector<128x256xbf16>, vector<16x256xf32> -> vector<16x256xf32>
    %7 = arith.addf %3, %6 : vector<16x256xf32>
    %c0_6 = arith.constant 0 : index
    %c0_7 = arith.constant 0 : index
    %8 = vector.load %arg6[%c0_6, %c0_7] : memref<16x256xf32, #tpu.memory_space<vmem>>, vector<16x256xf32>
    tpu.vector_store %arg6[%c0_6, %c0_7], %7 {strides = array<i32>} : memref<16x256xf32, #tpu.memory_space<vmem>>, vector<16x256xf32>,
    return
  }
  func.func @transform_0(%arg0: i32, %arg1: i32, %arg2: i32) -> (i32, i32) {
    %c0_i32 = arith.constant 0 : i32
    return %arg0, %arg2 : i32, i32
  }
  func.func @transform_1(%arg0: i32, %arg1: i32, %arg2: i32) -> (i32, i32) {
    %c0_i32 = arith.constant 0 : i32
    return %arg2, %arg1 : i32, i32
  }
  func.func @transform_2(%arg0: i32, %arg1: i32, %arg2: i32) -> (i32, i32) {
    %c0_i32 = arith.constant 0 : i32
    %c0_i32_0 = arith.constant 0 : i32
    return %c0_i32, %arg1 : i32, i32
  }
  func.func @transform_3(%arg0: i32, %arg1: i32, %arg2: i32) -> (i32, i32) {
    %c0_i32 = arith.constant 0 : i32
    return %arg0, %arg1 : i32, i32
  }
}

</mosaic_0001>

<llo_original>
// kernel: _linear_forward_2d.1
$region0: #{_linear_forward_2d.1}
  #allocation0 [shape = 'u32[]', space=smem, size = 0x4, offset = 0x4, fixed_abs, tag = 'smem constant byte address 0x4 - core index']
  #allocation1 [shape = 'u32[144,128]{1,0:T(1,128)}', space=vmem, size = 0x12000, scoped, tag = 'internal scratch']
  %s0 = inlined_call_operand.vmem [shape: bf16[16,128], index: 0, kind: input, shape index: {}]
  %s1 = inlined_call_operand.hbm [shape: bf16[128,256], index: 1, kind: input, shape index: {}]
  %s2 = inlined_call_operand.vmem [shape: f32[1,256], index: 2, kind: input, shape index: {}]
  %s3 = inlined_call_operand.hbm [shape: f32[16,256], index: 3, kind: output, shape index: {}]
  %s4 = sld [smem:[#allocation0]]
  $region30: #{_linear_forward_2d.1} parent=0
    _
  %s6 = ssub.s32 1, %s4
  %s7 = scalar_select 0, %s6, %s4
  $region1: #{_linear_forward_2d.1} parent=0
    #allocation2 [shape = 'u8[65536]{0}', space=vmem, size = 0x10000, scoped, tag = 'input window, operand 1, single buffered']
    #allocation3 [shape = 's32[1]{0}', space=sflag, size = 0x4, scoped, tag = 'scoped memory for _linear_forward_2d.1']
    #allocation4 [shape = 's32[1]{0}', space=sflag, size = 0x4, scoped, tag = 'scoped memory for _linear_forward_2d.1']
    #allocation5 [shape = 'u8[16384]{0}', space=vmem, size = 0x4000, scoped, tag = 'output window, operand 0, single buffered']
    %8 = vsyncpa [#allocation3], 0
    %9 = vsyncpa [#allocation4], 0
    // Predicated region
    $region2: #{_linear_forward_2d.1} parent=1 // pred_check
      _
    $region3: #{_linear_forward_2d.1} parent=1 // pred_check_branch
      %11 = sbr.rel (0) target = $region5
    $region4: #{_linear_forward_2d.1} parent=1 // pred_region
      _
    $region5: #{_linear_forward_2d.1} parent=1 // pred_fallthru
      _
    // Predicated region
    $region6: #{_linear_forward_2d.1} parent=1 // pred_check
      _
    $region7: #{_linear_forward_2d.1} parent=1 // pred_check_branch
      %13 = sbr.rel (0) target = $region9
    $region8: #{_linear_forward_2d.1} parent=1 // pred_region
      %s15 = ssub.s32 2048, 2048
      %16 = vsyncadd [#allocation3], %s15
      %s17 = sshll.u32 [#allocation2], 4
      %s18 = int_to_ptr.vmem [resolvable:$true] %s17
      %23 = dma.hbm_to_vmem [thread:$0]  %s1, 2048, %s18, [#allocation3], 128, 128, 8
    $region9: #{_linear_forward_2d.1} parent=1 // pred_fallthru
      _
    // Predicated region
    $region10: #{_linear_forward_2d.1} parent=1 // pred_check
      _
    $region11: #{_linear_forward_2d.1} parent=1 // pred_check_branch
      %25 = sbr.rel (0) target = $region13
    $region12: #{_linear_forward_2d.1} parent=1 // pred_region
      _
    $region13: #{_linear_forward_2d.1} parent=1 // pred_fallthru
      _
    // Predicated region
    $region14: #{_linear_forward_2d.1} parent=1 // pred_check
      _
    $region15: #{_linear_forward_2d.1} parent=1 // pred_check_branch
      %27 = sbr.rel (0) target = $region17
    $region16: #{_linear_forward_2d.1} parent=1 // pred_region
      %28 = dma.done [#allocation3], 2048
    $region17: #{_linear_forward_2d.1} parent=1 // pred_fallthru
      _
    %p30 = scmp.eq.s32.totalorder 0, 0
    // Predicated region
    $region18: #{_linear_forward_2d.1} parent=1 // pred_check
      %p31 = pneg %p30
    $region19: #{_linear_forward_2d.1} parent=1 // pred_check_branch
      %33 = sbr.rel (%p31) target = $region21
    $region20: #{_linear_forward_2d.1} parent=1 // pred_region
      %v34 = vld [vmem:[%s2] sm:$0x3]
      %v36 = vlaneseq
      %v37 = vshrl.u32 %v36, 7
      %v38 = vsub.s32 0, %v37
      %v39 = vrot.slane %v34, %v38
      %v40 = vlaneseq
      %v41 = vshrl.u32 %v40, 7
      %v42 = vsub.s32 1, %v41
      %v43 = vrot.slane %v34, %v42
      %46 = vst [vmem:[#allocation5] sm:$0xff] %v39
      %47 = vst [vmem:[#allocation5 + $0x8] sm:$0xff] %v43
      %48 = vst [vmem:[#allocation5 + $0x10] sm:$0xff] %v39
      %49 = vst [vmem:[#allocation5 + $0x18] sm:$0xff] %v43
    $region21: #{_linear_forward_2d.1} parent=1 // pred_fallthru
      _
    %v50 = vld [vmem:[#allocation5] sm:$0xff]
    %v51 = vld [vmem:[#allocation5 + $0x8] sm:$0xff]
    %v52 = vld [vmem:[#allocation5 + $0x10] sm:$0xff]
    %v53 = vld [vmem:[#allocation5 + $0x18] sm:$0xff]
    %v54 = vld [vmem:[%s0] sm:$0xf]
    %v55 = vld [vmem:[%s0 + $0x4] sm:$0xf]
    %v56 = vld [vmem:[#allocation2] sm:$0xff]
    %v57 = vld [vmem:[#allocation2 + $0x8] sm:$0xff]
    %v58 = vld [vmem:[#allocation2 + $0x10] sm:$0xff]
    %v59 = vld [vmem:[#allocation2 + $0x18] sm:$0xff]
    %v60 = vld [vmem:[#allocation2 + $0x20] sm:$0xff]
    %v61 = vld [vmem:[#allocation2 + $0x28] sm:$0xff]
    %v62 = vld [vmem:[#allocation2 + $0x30] sm:$0xff]
    %v63 = vld [vmem:[#allocation2 + $0x38] sm:$0xff]
    %v64 = vld [vmem:[#allocation2 + $0x40] sm:$0xff]
    %v65 = vld [vmem:[#allocation2 + $0x48] sm:$0xff]
    %v66 = vld [vmem:[#allocation2 + $0x50] sm:$0xff]
    %v67 = vld [vmem:[#allocation2 + $0x58] sm:$0xff]
    %v68 = vld [vmem:[#allocation2 + $0x60] sm:$0xff]
    %v69 = vld [vmem:[#allocation2 + $0x68] sm:$0xff]
    %v70 = vld [vmem:[#allocation2 + $0x70] sm:$0xff]
    %v71 = vld [vmem:[#allocation2 + $0x78] sm:$0xff]
    %v74 = vunpack.c.l.b16 %v54
    %v75 = vunpack.c.l.b16 %v55
    %v76 = vpack.c.b16 %v75, %v74
    %v94 = vunpack.c.l.b16 %v56
    %v95 = vunpack.c.h.b16 %v56
    %v96 = vunpack.c.l.b16 %v57
    %v97 = vunpack.c.h.b16 %v57
    %v98 = vunpack.c.l.b16 %v58
    %v99 = vunpack.c.h.b16 %v58
    %v100 = vunpack.c.l.b16 %v59
    %v101 = vunpack.c.h.b16 %v59
    %v102 = vunpack.c.l.b16 %v60
    %v103 = vunpack.c.h.b16 %v60
    %v104 = vunpack.c.l.b16 %v61
    %v105 = vunpack.c.h.b16 %v61
    %v106 = vunpack.c.l.b16 %v62
    %v107 = vunpack.c.h.b16 %v62
    %v108 = vunpack.c.l.b16 %v63
    %v109 = vunpack.c.h.b16 %v63
    %v110 = vunpack.c.l.b16 %v64
    %v111 = vunpack.c.h.b16 %v64
    %v112 = vunpack.c.l.b16 %v65
    %v113 = vunpack.c.h.b16 %v65
    %v114 = vunpack.c.l.b16 %v66
    %v115 = vunpack.c.h.b16 %v66
    %v116 = vunpack.c.l.b16 %v67
    %v117 = vunpack.c.h.b16 %v67
    %v118 = vunpack.c.l.b16 %v68
    %v119 = vunpack.c.h.b16 %v68
    %v120 = vunpack.c.l.b16 %v69
    %v121 = vunpack.c.h.b16 %v69
    %v122 = vunpack.c.l.b16 %v70
    %v123 = vunpack.c.h.b16 %v70
    %v124 = vunpack.c.l.b16 %v71
    %v125 = vunpack.c.h.b16 %v71
    %v126 = vpack.c.b16 %v96, %v94
    %v127 = vpack.c.b16 %v97, %v95
    %v128 = vpack.c.b16 %v100, %v98
    %v129 = vpack.c.b16 %v101, %v99
    %v130 = vpack.c.b16 %v104, %v102
    %v131 = vpack.c.b16 %v105, %v103
    %v132 = vpack.c.b16 %v108, %v106
    %v133 = vpack.c.b16 %v109, %v107
    %v134 = vpack.c.b16 %v112, %v110
    %v135 = vpack.c.b16 %v113, %v111
    %v136 = vpack.c.b16 %v116, %v114
    %v137 = vpack.c.b16 %v117, %v115
    %v138 = vpack.c.b16 %v120, %v118
    %v139 = vpack.c.b16 %v121, %v119
    %v140 = vpack.c.b16 %v124, %v122
    %v141 = vpack.c.b16 %v125, %v123
    %158 = vmatprep.subr.bf16.mxu0 %v141
    %159 = vmatpush1.bf16.msra.mxu0 %v140
    %160 = vmatprep.subr.bf16.mxu0 %v139
    %161 = vmatpush1.bf16.msra.mxu0 %v138
    %162 = vmatprep.subr.bf16.mxu0 %v137
    %163 = vmatpush1.bf16.msra.mxu0 %v136
    %164 = vmatprep.subr.bf16.mxu0 %v135
    %165 = vmatpush1.bf16.msra.mxu0 %v134
    %166 = vmatprep.subr.bf16.mxu0 %v133
    %167 = vmatpush1.bf16.msra.mxu0 %v132
    %168 = vmatprep.subr.bf16.mxu0 %v131
    %169 = vmatpush1.bf16.msra.mxu0 %v130
    %170 = vmatprep.subr.bf16.mxu0 %v129
    %171 = vmatpush1.bf16.msra.mxu0 %v128
    %172 = vmatprep.subr.bf16.mxu0 %v127
    %173 = vmatpush1.bf16.msra.mxu0 %v126
    %174 = vmatprep.subr.bf16.mxu0 0
    %175 = vmatpush2.bf16.msra.mxu0 0
    %176 = vmatprep.subr.bf16.mxu0 0
    %177 = vmatpush2.bf16.msra.mxu0 0
    %178 = vmatprep.subr.bf16.mxu0 0
    %179 = vmatpush2.bf16.msra.mxu0 0
    %180 = vmatprep.subr.bf16.mxu0 0
    %181 = vmatpush2.bf16.msra.mxu0 0
    %182 = vmatprep.subr.bf16.mxu0 0
    %183 = vmatpush2.bf16.msra.mxu0 0
    %184 = vmatprep.subr.bf16.mxu0 0
    %185 = vmatpush2.bf16.msra.mxu0 0
    %186 = vmatprep.subr.bf16.mxu0 0
    %187 = vmatpush2.bf16.msra.mxu0 0
    %188 = vmatprep.subr.bf16.mxu0 0
    %189 = vmatpush2.bf16.msra.mxu0 0
    %190 = vmatprep.mubr.bf16.mxu0 0
    %191 = vmatmul.mubr.bf16.gmra.mxu0 %v76
    %v192 = vpop.f32.mrf.mxu0
    %v193 = vadd.f32 0.0, %v192
    %v194 = vpop.f32.mrf.mxu0
    %v195 = vadd.f32 0.0, %v194
    %v196 = vpop.f32.mrf.mxu0
    %v197 = vadd.f32 0.0, %v196
    %v198 = vpop.f32.mrf.mxu0
    %v199 = vadd.f32 0.0, %v198
    %200 = vdwg.mxu0
    %v201 = vadd.f32 %v50, %v193
    %v202 = vadd.f32 %v51, %v195
    %v203 = vadd.f32 %v52, %v197
    %v204 = vadd.f32 %v53, %v199
    %205 = vst [vmem:[#allocation5] sm:$0xff] %v201
    %206 = vst [vmem:[#allocation5 + $0x8] sm:$0xff] %v202
    %207 = vst [vmem:[#allocation5 + $0x10] sm:$0xff] %v203
    %208 = vst [vmem:[#allocation5 + $0x18] sm:$0xff] %v204
    // Predicated region
    $region22: #{_linear_forward_2d.1} parent=1 // pred_check
      _
    $region23: #{_linear_forward_2d.1} parent=1 // pred_check_branch
      %210 = sbr.rel (0) target = $region25
    $region24: #{_linear_forward_2d.1} parent=1 // pred_region
      %s212 = ssub.s32 512, 512
      %213 = vsyncadd [#allocation4], %s212
      %s214 = sshll.u32 [#allocation5], 4
      %s215 = int_to_ptr.vmem [resolvable:$true] %s214
      %220 = dma.vmem_to_hbm [thread:$0]  %s215, 512, %s3, [#allocation4], 256, 256, 16
    $region25: #{_linear_forward_2d.1} parent=1 // pred_fallthru
      _
    // Predicated region
    $region26: #{_linear_forward_2d.1} parent=1 // pred_check
      _
    $region27: #{_linear_forward_2d.1} parent=1 // pred_check_branch
      %222 = sbr.rel (0) target = $region29
    $region28: #{_linear_forward_2d.1} parent=1 // pred_region
      %223 = dma.done [#allocation4], 512
    $region29: #{_linear_forward_2d.1} parent=1 // pred_fallthru
      _
    %224 = vsyncpa [#allocation3], 1
    %225 = vsyncpa [#allocation4], 1

</llo_original>
